<compile_context>
chip_gen: v7x
topology: tpu7x:2x2x1
jax: 0.10.0
libtpu: 0.0.40
codegen_flags: <defaults>
</compile_context>

<pallas_src>
import functools
import math

import jax
import jax.numpy as jnp
from jax import lax
from jax.experimental import pallas as pl
from jax.experimental.pallas import tpu as pltpu


# --------------------------- Pallas conv-GEMM kernel -------------------------

def _matmul_bias_kernel(a_ref, b_ref, bias_ref, o_ref, *, relu):
    # MXU matmul (bf16 operands), f32 accumulation, f32 bias/ReLU epilogue.
    acc = jnp.dot(a_ref[...], b_ref[...], preferred_element_type=jnp.float32)
    acc = acc + bias_ref[...]
    if relu:
        acc = jnp.maximum(acc, 0.0)
    o_ref[...] = acc.astype(o_ref.dtype)


def matmul_bias(a, b, bias2d, *, relu=False, tile_n=384):
    """(M,K) @ (K,N) + bias [+ReLU] -> f32 (M,N).  N must be a multiple of 128;
    the GEMM is tiled over N with a "parallel" grid axis (both v7x TensorCores
    get work) and every store is a full lane tile."""
    M, K = a.shape
    K2, N = b.shape
    assert K == K2 and N % 128 == 0
    tile_n = min(tile_n, N)
    while N % tile_n:           # pick a tile (multiple of 128) that divides N
        tile_n -= 128
    return pl.pallas_call(
        functools.partial(_matmul_bias_kernel, relu=relu),
        out_shape=jax.ShapeDtypeStruct((M, N), jnp.float32),
        grid=(N // tile_n,),
        in_specs=[
            pl.BlockSpec((M, K), lambda j: (0, 0)),
            pl.BlockSpec((K, tile_n), lambda j: (0, j)),
            pl.BlockSpec((M, 1), lambda j: (0, 0)),
        ],
        out_specs=pl.BlockSpec((M, tile_n), lambda j: (0, j)),
        compiler_params=pltpu.CompilerParams(dimension_semantics=("parallel",)),
    )(a, b, bias2d.astype(jnp.float32))


# ----------------------------- conv / pool glue ------------------------------

def conv2d_nchw(x, w, b, *, relu=False):
    """Valid conv, stride 1, as a (Cout, Kp) @ (Kp, Np) Pallas GEMM with the
    output lane dimension = padded B*Ho*Wo.  Both GEMM dims are zero-padded to
    multiples of 128 (aligned MXU ingest, unmasked lane-dense stores)."""
    B, C, H, W = x.shape
    Cout, Cin, kh, kw = w.shape
    Ho, Wo = H - kh + 1, W - kw + 1
    K = Cin * kh * kw
    N = B * Ho * Wo
    # TODO(synk): pull the im2col (and the whole conv1->pool->conv2->pool chain)
    # into a single Pallas kernel; kept as XLA glue here because the flattened
    # output-pixel merge would need in-kernel cross-tile relayout reshapes.
    patches = jnp.stack(
        [x[:, :, dy:dy + Ho, dx:dx + Wo] for dy in range(kh) for dx in range(kw)],
        axis=2,
    )                                                # (B, Cin, kh*kw, Ho, Wo)
    patches = patches.reshape(B, K, Ho * Wo).transpose(1, 0, 2).reshape(K, N)
    wmat = w.reshape(Cout, K)
    Kp = pl.cdiv(K, 128) * 128
    Np = pl.cdiv(N, 128) * 128
    patches = jnp.pad(patches, ((0, Kp - K), (0, Np - N)))
    wmat = jnp.pad(wmat, ((0, 0), (0, Kp - K)))
    out = matmul_bias(
        wmat.astype(jnp.bfloat16),
        patches.astype(jnp.bfloat16),
        b.reshape(Cout, 1),
        relu=relu,
    )                                                # (Cout, Np) f32
    return out[:, :N].reshape(Cout, B, Ho, Wo).transpose(1, 0, 2, 3)


def maxpool2x2(x):
    """MaxPool2d(2, 2), floor mode (drops trailing odd row/col). XLA glue."""
    B, C, H, W = x.shape
    He, We = (H // 2) * 2, (W // 2) * 2
    x = x[:, :, :He, :We].reshape(B, C, He // 2, 2, We // 2, 2)
    return x.max(axis=(3, 5))


# -------- fused fc_loc + affine_grid + grid_sample Pallas kernel -------------

def _stn_sample_kernel(grid_ref, feat_ref, w1_ref, b1_ref, w2_ref, b2_ref,
                       x_ref, o_ref, *, C, H, W):
    # One grid step = TP output pixels of one batch element.
    #
    # --- fc_loc fused in: theta = relu(feat_b @ w1 + b1) @ w2 + b2 (f32) ------
    b = pl.program_id(0)
    frow = feat_ref[pl.ds(b, 1), :]                                   # (1, F)
    h = jnp.dot(frow, w1_ref[...], preferred_element_type=jnp.float32)
    h = jnp.maximum(h + b1_ref[...], 0.0)                             # (1, 32)
    th = jnp.dot(h, w2_ref[...], preferred_element_type=jnp.float32) + b2_ref[...]
    # th = (1, 6) = [t00 t01 t02 t10 t11 t12]

    # --- affine_grid (align_corners=False): VPU FMAs, no MXU -----------------
    xn = grid_ref[0:1, :]                          # (1, TP) base-grid x coord
    yn = grid_ref[1:2, :]                          # (1, TP) base-grid y coord
    gx = th[0:1, 0:1] * xn + th[0:1, 1:2] * yn + th[0:1, 2:3]
    gy = th[0:1, 3:4] * xn + th[0:1, 4:5] * yn + th[0:1, 5:6]

    # --- grid_sample (bilinear, padding_mode='zeros', align_corners=False) ---
    ix = ((gx + 1.0) * W - 1.0) * 0.5              # (1, TP) sample col
    iy = ((gy + 1.0) * H - 1.0) * 0.5              # (1, TP) sample row
    tp = ix.shape[1]
    rx = lax.broadcasted_iota(jnp.int32, (W, tp), 0).astype(jnp.float32)
    ry = lax.broadcasted_iota(jnp.int32, (H, tp), 0).astype(jnp.float32)
    # Separable tent weights; out-of-range samples get weight 0 for free.
    wx = jnp.maximum(1.0 - jnp.abs(rx - ix), 0.0)  # (W, TP)
    wy = jnp.maximum(1.0 - jnp.abs(ry - iy), 0.0)  # (H, TP)

    # Stage 1 (MXU): contract over input columns:  (C*H, W) @ (W, TP)
    tmp = jnp.dot(x_ref[0], wx, preferred_element_type=jnp.float32)   # (C*H, TP)
    # Stage 2 (VPU/XLU): weight by wy and reduce over input rows, per channel.
    for c in range(C):                              # static unroll, C is tiny
        part = tmp[c * H:(c + 1) * H, :] * wy                          # (H, TP)
        o_ref[0, c:c + 1, :] = jnp.sum(part, axis=0, keepdims=True)


def stn_sample(x, feat, w1, b1, w2, b2, *, tp=256):
    """Fused fc_loc + F.affine_grid + F.grid_sample.
    x: (B, C, H, W), feat: (B, F) -> (B, C, H, W).  Output pixels padded to a
    multiple of tp so every store is lane-dense; the pad tail is sliced off."""
    B, C, H, W = x.shape
    HW = H * W
    HWp = pl.cdiv(HW, tp) * tp
    F_in = feat.shape[1]
    Nh = w1.shape[1]

    # Precomputed base-grid normalized coords -> no int div/mod in the kernel.
    ii, jj = jnp.meshgrid(jnp.arange(H, dtype=jnp.float32),
                          jnp.arange(W, dtype=jnp.float32), indexing="ij")
    xn = (2.0 * jj + 1.0) / W - 1.0
    yn = (2.0 * ii + 1.0) / H - 1.0
    base = jnp.stack([xn.reshape(HW), yn.reshape(HW)], axis=0)   # (2, HW)
    base = jnp.pad(base, ((0, 0), (0, HWp - HW)))

    x2d = x.reshape(B, C * H, W).astype(jnp.float32)

    out = pl.pallas_call(
        functools.partial(_stn_sample_kernel, C=C, H=H, W=W),
        out_shape=jax.ShapeDtypeStruct((B, C, HWp), jnp.float32),
        grid=(B, HWp // tp),
        in_specs=[
            pl.BlockSpec((2, tp), lambda b, t: (0, t)),
            pl.BlockSpec((B, F_in), lambda b, t: (0, 0)),
            pl.BlockSpec((F_in, Nh), lambda b, t: (0, 0)),
            pl.BlockSpec((1, Nh), lambda b, t: (0, 0)),
            pl.BlockSpec((Nh, 6), lambda b, t: (0, 0)),
            pl.BlockSpec((1, 6), lambda b, t: (0, 0)),
            pl.BlockSpec((1, C * H, W), lambda b, t: (b, 0, 0)),
        ],
        out_specs=pl.BlockSpec((1, C, tp), lambda b, t: (b, 0, t)),
        compiler_params=pltpu.CompilerParams(
            dimension_semantics=("parallel", "parallel")),
    )(base,
      feat.astype(jnp.float32),
      w1.astype(jnp.float32),
      b1.reshape(1, Nh).astype(jnp.float32),
      w2.astype(jnp.float32),
      b2.reshape(1, 6).astype(jnp.float32),
      x2d)
    return out[:, :, :HW].reshape(B, C, H, W)


# --------------------------------- STN model ---------------------------------

def init_stn_params(key, in_channels, input_shape):
    mid = in_channels * 2
    out_ch = in_channels * 3
    h_in, w_in = input_shape
    h_out = math.floor((h_in - 14) / 4)
    w_out = math.floor((w_in - 14) / 4)
    k1, k2, k3 = jax.random.split(key, 3)

    def uinit(k, shape, fan_in):
        bound = 1.0 / math.sqrt(fan_in)
        return jax.random.uniform(k, shape, jnp.float32, -bound, bound)

    params = {
        "conv1_w": uinit(k1, (mid, in_channels, 7, 7), in_channels * 49),
        "conv1_b": jnp.zeros((mid,), jnp.float32),
        "conv2_w": uinit(k2, (out_ch, mid, 5, 5), mid * 25),
        "conv2_b": jnp.zeros((out_ch,), jnp.float32),
        "fc1_w": uinit(k3, (32, out_ch * h_out * w_out), out_ch * h_out * w_out),
        "fc1_b": jnp.zeros((32,), jnp.float32),
        # exactly as the PyTorch __init__: zero weight, identity-affine bias
        "fc2_w": jnp.zeros((6, 32), jnp.float32),
        "fc2_b": jnp.array([1.0, 0.0, 0.0, 0.0, 1.0, 0.0], jnp.float32),
    }
    meta = dict(out_channels=out_ch, h_out=h_out, w_out=w_out)
    return params, meta


def stn_forward(params, meta, x):
    B = x.shape[0]
    # localization: Conv(7) -> MaxPool(2,2) -> ReLU -> Conv(5) -> MaxPool(2,2) -> ReLU
    # (ReLU fused into the conv GEMM; equivalent since relu∘maxpool == maxpool∘relu)
    y = conv2d_nchw(x, params["conv1_w"], params["conv1_b"], relu=True)
    y = maxpool2x2(y)
    y = conv2d_nchw(y, params["conv2_w"], params["conv2_b"], relu=True)
    y = maxpool2x2(y)
    feat = y.reshape(B, meta["out_channels"] * meta["h_out"] * meta["w_out"])
    # fc_loc + affine_grid + grid_sample are fused into one pallas_call.
    return stn_sample(x, feat, params["fc1_w"].T, params["fc1_b"],
                      params["fc2_w"].T, params["fc2_b"])


if __name__ == "__main__":
    # spatial size must satisfy floor((S-14)/4) >= 1, so use 24x24
    B, C, H, W = 2, 4, 24, 24
    key = jax.random.PRNGKey(0)
    kx, kp = jax.random.split(key)
    x = jax.random.normal(kx, (B, C, H, W), jnp.float32)
    params, meta = init_stn_params(kp, C, (H, W))

    out = stn_forward(params, meta, x)
    out = jax.block_until_ready(out)
    assert out.shape == (B, C, H, W)

    # sanity 1: bf16-MXU im2col conv matches a lax.conv reference on
    # bf16-rounded operands (both accumulate in f32).
    xb = x.astype(jnp.bfloat16).astype(jnp.float32)
    wb = params["conv1_w"].astype(jnp.bfloat16).astype(jnp.float32)
    ref_c1 = jax.lax.conv_general_dilated(
        xb, wb, (1, 1), "VALID",
        dimension_numbers=("NCHW", "OIHW", "NCHW"),
        precision=jax.lax.Precision.HIGHEST,
    ) + params["conv1_b"][None, :, None, None]
    got_c1 = conv2d_nchw(x, params["conv1_w"], params["conv1_b"], relu=False)
    assert jnp.allclose(got_c1, ref_c1, atol=5e-3, rtol=5e-3)

    # sanity 2: fc_loc is initialized to the identity affine (and the sampling
    # path is f32 with exact one-hot tent weights), so grid_sample(x) == x.
    assert jnp.allclose(out, x, atol=1e-3, rtol=1e-3)

    print("KERNEL_OK")
</pallas_src>

<mosaic_0001>
module attributes {stable_mosaic.version = 11 : i64} {
  func.func @_matmul_bias_kernel(%arg0: i32, %arg1: memref<8x256xbf16, #tpu.memory_space<vmem>>, %arg2: memref<256x384xbf16, #tpu.memory_space<vmem>>, %arg3: memref<8x1xf32, #tpu.memory_space<vmem>>, %arg4: memref<8x384xf32, #tpu.memory_space<vmem>>) attributes {dimension_semantics = [#tpu.dimension_semantics<parallel>], iteration_bounds = array<i64: 2>, scalar_prefetch = 0 : i64, scratch_operands = 0 : i64, tpu.core_type = #tpu.core_type<tc>, window_params = [{pipeline_mode = #tpu.pipeline_mode<synchronous>, transform_indices = @transform_0, window_bounds = array<i64: 8, 256>}, {transform_indices = @transform_1, window_bounds = array<i64: 256, 384>}, {pipeline_mode = #tpu.pipeline_mode<synchronous>, transform_indices = @transform_2, window_bounds = array<i64: 8, 1>}, {transform_indices = @transform_3, window_bounds = array<i64: 8, 384>}]} {
    %c0 = arith.constant 0 : index
    %c0_0 = arith.constant 0 : index
    %0 = vector.load %arg1[%c0, %c0_0] : memref<8x256xbf16, #tpu.memory_space<vmem>>, vector<8x256xbf16>
    %c0_1 = arith.constant 0 : index
    %c0_2 = arith.constant 0 : index
    %1 = vector.load %arg2[%c0_1, %c0_2] : memref<256x384xbf16, #tpu.memory_space<vmem>>, vector<256x384xbf16>
    %cst = arith.constant dense<0.000000e+00> : vector<8x384xf32>
    %2 = tpu.matmul %0, %1, %cst {dimension_numbers = #tpu.dot_dimension_numbers<[1], [0], [0], [1], [0, 0, 1, 1], [], []>} : vector<8x256xbf16>, vector<256x384xbf16>, vector<8x384xf32> -> vector<8x384xf32>
    %c0_3 = arith.constant 0 : index
    %c0_4 = arith.constant 0 : index
    %3 = vector.load %arg3[%c0_3, %c0_4] : memref<8x1xf32, #tpu.memory_space<vmem>>, vector<8x1xf32>
    %4 = vector.broadcast %3 : vector<8x1xf32> to vector<8x384xf32>
    %5 = arith.addf %2, %4 : vector<8x384xf32>
    %cst_5 = arith.constant 0.000000e+00 : f32
    %6 = vector.broadcast %cst_5 : f32 to vector<8x384xf32>
    %7 = arith.maximumf %5, %6 : vector<8x384xf32>
    %c0_6 = arith.constant 0 : index
    %c0_7 = arith.constant 0 : index
    %8 = vector.load %arg4[%c0_6, %c0_7] : memref<8x384xf32, #tpu.memory_space<vmem>>, vector<8x384xf32>
    tpu.vector_store %arg4[%c0_6, %c0_7], %7 {strides = array<i32>} : memref<8x384xf32, #tpu.memory_space<vmem>>, vector<8x384xf32>,
    return
  }
  func.func @transform_0(%arg0: i32) -> (i32, i32) {
    %c0_i32 = arith.constant 0 : i32
    %c0_i32_0 = arith.constant 0 : i32
    %c0_i32_1 = arith.constant 0 : i32
    return %c0_i32, %c0_i32_0 : i32, i32
  }
  func.func @transform_1(%arg0: i32) -> (i32, i32) {
    %c0_i32 = arith.constant 0 : i32
    %c0_i32_0 = arith.constant 0 : i32
    return %c0_i32, %arg0 : i32, i32
  }
  func.func @transform_2(%arg0: i32) -> (i32, i32) {
    %c0_i32 = arith.constant 0 : i32
    %c0_i32_0 = arith.constant 0 : i32
    %c0_i32_1 = arith.constant 0 : i32
    return %c0_i32, %c0_i32_0 : i32, i32
  }
  func.func @transform_3(%arg0: i32) -> (i32, i32) {
    %c0_i32 = arith.constant 0 : i32
    %c0_i32_0 = arith.constant 0 : i32
    return %c0_i32, %arg0 : i32, i32
  }
}

</mosaic_0001>

<llo_original>
// kernel: tpu_custom_call.1
$region0: #{tpu_custom_call.1}
  #allocation0 [shape = 'u32[]', space=smem, size = 0x4, offset = 0x4, fixed_abs, tag = 'smem constant byte address 0x4 - core index']
  #allocation1 [shape = 'u32[144,128]{1,0:T(1,128)}', space=vmem, size = 0x12000, scoped, tag = 'internal scratch']
  %s0 = inlined_call_operand.vmem [shape: bf16[8,256], index: 0, kind: input, shape index: {}]
  %s1 = inlined_call_operand.hbm [shape: bf16[256,768], index: 1, kind: input, shape index: {}]
  %s2 = inlined_call_operand.vmem [shape: f32[8,1], index: 2, kind: input, shape index: {}]
  %s3 = inlined_call_operand.hbm [shape: f32[8,768], index: 3, kind: output, shape index: {}]
  %s4 = sld [smem:[#allocation0]]
  $region49: #{tpu_custom_call.1} parent=0
    _
  %s6 = ssub.s32 1, %s4
  %s7 = scalar_select 0, %s6, %s4
  $region1: #{tpu_custom_call.1} parent=0
    #allocation2 [shape = 'u8[393216]{0}', space=vmem, size = 0x60000, scoped, tag = 'input window, operand 1']
    #allocation3 [shape = 's32[2]{0}', space=sflag, size = 0x8, scoped, tag = 'scoped memory for tpu_custom_call.1']
    #allocation4 [shape = 's32[2]{0}', space=sflag, size = 0x8, scoped, tag = 'scoped memory for tpu_custom_call.1']
    #allocation5 [shape = 'u8[24576]{0}', space=vmem, size = 0x6000, scoped, tag = 'output window, operand 0']
    %8 = vsyncpa [#allocation3], 0
    %s9 = scalar_lea.sflag [#allocation3], 1
    %10 = vsyncpa %s9, 0
    %11 = vsyncpa [#allocation4], 0
    %s12 = scalar_lea.sflag [#allocation4], 1
    %13 = vsyncpa %s12, 0
    loop: start=0, step=1, limit=4
    $region2: #{tpu_custom_call.1} parent=1 // loop_pre_header
      _
    $region3: #{tpu_custom_call.1} parent=1 // loop_header
      %s15 = sphi 0, %s19
      %p16 = scmp.ge.s32.totalorder %s15, 4
      %s23 = sphi 0, %s23
      %s25 = sphi 0, %s23
      %s26 = sphi 0, %s25
      %s40 = sphi 0, %s26
      %s46 = sphi 0, %s48
      %s49 = sphi 0, %s46
      %s50 = sphi 0, %s49
      %s66 = sphi 0, %s50
      %s70 = sphi 0, %s70
      %s72 = sphi 0, %s70
      %s73 = sphi 0, %s72
      %s87 = sphi 0, %s73
      %s93 = sphi 0, %s95
      %s96 = sphi 0, %s93
      %s97 = sphi 0, %s96
      %s113 = sphi 0, %s97
    $region4: #{tpu_custom_call.1} parent=1 // loop_header_branch
      %18 = sbr.rel (%p16) target = $region8
    $region5: #{tpu_custom_call.1} parent=1 // loop_body
      %s20 = ssub.s32 %s15, 1
      %s21 = ssub.s32 %s15, 2
      %s22 = sadd.s32 %s15, 1
      %s24 = sadd.s32 %s23, 1
      %p27 = scmp.eq.s32.totalorder %s15, 1
      %p28 = scmp.ne.s32.totalorder %s23, %s25
      %p29 = scmp.eq.s32.totalorder %s15, 0
      %p30 = por %p28, %p29
      %p31 = scmp.ne.s32.totalorder %s23, %s25
      %p32 = scmp.eq.s32.totalorder %s20, 1
      %p33 = por %p31, %p32
      %p34 = scmp.ne.s32.totalorder %s25, %s26
      %p35 = scmp.eq.s32.totalorder %s20, 0
      %p36 = por %p34, %p35
      %p37 = scmp.ne.s32.totalorder %s25, %s26
      %p38 = scmp.eq.s32.totalorder %s21, 1
      %p39 = por %p37, %p38
      %p41 = scmp.ne.s32.totalorder %s26, %s40
      %p42 = scmp.eq.s32.totalorder %s21, 0
      %p43 = por %p41, %p42
      %s44 = ssub.s32 %s15, %s22
      %p45 = scmp.eq.s32.totalorder %s44, 0
      %s47 = sadd.s32 %s46, 1
      %s48 = scalar_select %p45, %s46, %s47
      %p51 = pneg %p45
      %p52 = scmp.eq.s32.totalorder %s15, 1
      %p53 = por %p51, %p52
      %p54 = scmp.ne.s32.totalorder %s46, %s49
      %p55 = scmp.eq.s32.totalorder %s15, 0
      %p56 = por %p54, %p55
      %p57 = scmp.ne.s32.totalorder %s46, %s49
      %p58 = scmp.eq.s32.totalorder %s20, 1
      %p59 = por %p57, %p58
      %p60 = scmp.ne.s32.totalorder %s49, %s50
      %p61 = scmp.eq.s32.totalorder %s20, 0
      %p62 = por %p60, %p61
      %p63 = scmp.ne.s32.totalorder %s49, %s50
      %p64 = scmp.eq.s32.totalorder %s21, 1
      %p65 = por %p63, %p64
      %p67 = scmp.ne.s32.totalorder %s50, %s66
      %p68 = scmp.eq.s32.totalorder %s21, 0
      %p69 = por %p67, %p68
      %s71 = sadd.s32 %s70, 1
      %p74 = scmp.eq.s32.totalorder %s15, 1
      %p75 = scmp.ne.s32.totalorder %s70, %s72
      %p76 = scmp.eq.s32.totalorder %s15, 0
      %p77 = por %p75, %p76
      %p78 = scmp.ne.s32.totalorder %s70, %s72
      %p79 = scmp.eq.s32.totalorder %s20, 1
      %p80 = por %p78, %p79
      %p81 = scmp.ne.s32.totalorder %s72, %s73
      %p82 = scmp.eq.s32.totalorder %s20, 0
      %p83 = por %p81, %p82
      %p84 = scmp.ne.s32.totalorder %s72, %s73
      %p85 = scmp.eq.s32.totalorder %s21, 1
      %p86 = por %p84, %p85
      %p88 = scmp.ne.s32.totalorder %s73, %s87
      %p89 = scmp.eq.s32.totalorder %s21, 0
      %p90 = por %p88, %p89
      %s91 = ssub.s32 %s15, %s22
      %p92 = scmp.eq.s32.totalorder %s91, 0
      %s94 = sadd.s32 %s93, 1
      %s95 = scalar_select %p92, %s93, %s94
      %p98 = pneg %p92
      %p99 = scmp.eq.s32.totalorder %s15, 1
      %p100 = por %p98, %p99
      %p101 = scmp.ne.s32.totalorder %s93, %s96
      %p102 = scmp.eq.s32.totalorder %s15, 0
      %p103 = por %p101, %p102
      %p104 = scmp.ne.s32.totalorder %s93, %s96
      %p105 = scmp.eq.s32.totalorder %s20, 1
      %p106 = por %p104, %p105
      %p107 = scmp.ne.s32.totalorder %s96, %s97
      %p108 = scmp.eq.s32.totalorder %s20, 0
      %p109 = por %p107, %p108
      %p110 = scmp.ne.s32.totalorder %s96, %s97
      %p111 = scmp.eq.s32.totalorder %s21, 1
      %p112 = por %p110, %p111
      %p114 = scmp.ne.s32.totalorder %s97, %s113
      %p115 = scmp.eq.s32.totalorder %s21, 0
      %p116 = por %p114, %p115
      %p117 = scmp.le.s32.totalorder 1, %s15
      %p118 = scmp.lt.s32.totalorder %s15, 3
      %p119 = pnand %p117, %p118
      %p120 = pneg %p119
      // Predicated region
      $region9: #{tpu_custom_call.1} parent=5 // pred_check
        _
      $region10: #{tpu_custom_call.1} parent=5 // pred_check_branch
        %122 = sbr.rel (%p119) target = $region12
      $region11: #{tpu_custom_call.1} parent=5 // pred_region
        %s123 = ssub.s32 %s15, 1
        // Predicated region
        $region13: #{tpu_custom_call.1} parent=11 // pred_check
          %p124 = pneg %p36
        $region14: #{tpu_custom_call.1} parent=11 // pred_check_branch
          %126 = sbr.rel (%p124) target = $region16
        $region15: #{tpu_custom_call.1} parent=11 // pred_region
          _
        $region16: #{tpu_custom_call.1} parent=11 // pred_fallthru
          _
        // Predicated region
        $region17: #{tpu_custom_call.1} parent=11 // pred_check
          %p127 = pneg %p83
        $region18: #{tpu_custom_call.1} parent=11 // pred_check_branch
          %129 = sbr.rel (%p127) target = $region20
        $region19: #{tpu_custom_call.1} parent=11 // pred_region
          _
        $region20: #{tpu_custom_call.1} parent=11 // pred_fallthru
          _
      $region12: #{tpu_custom_call.1} parent=5 // pred_fallthru
        _
      %p130 = scmp.lt.s32.totalorder %s15, 2
      // Predicated region
      $region21: #{tpu_custom_call.1} parent=5 // pred_check
        %p131 = pneg %p130
      $region22: #{tpu_custom_call.1} parent=5 // pred_check_branch
        %133 = sbr.rel (%p131) target = $region24
      $region23: #{tpu_custom_call.1} parent=5 // pred_region
        // Predicated region
        $region25: #{tpu_custom_call.1} parent=23 // pred_check
          %p134 = pneg %p56
        $region26: #{tpu_custom_call.1} parent=23 // pred_check_branch
          %136 = sbr.rel (%p134) target = $region28
        $region27: #{tpu_custom_call.1} parent=23 // pred_region
          %s137 = sand.u32 %s46, 1
          %s138 = scalar_lea.sflag [#allocation3], %s137
          %s139 = sand.u32 %s46, 1
          %s140 = smul.addr %s139, 384
          %s141 = scalar_lea.vmem [#allocation2], %s140
          %s142 = smul.u32 3, %s15
          %s144 = ssub.s32 6144, 6144
          %145 = vsyncadd %s138, %s144
          %s146 = smul.addr %s142, 64
          %s147 = scalar_lea.hbm %s1, %s146
          %s148 = sshll.u32 %s141, 4
          %s149 = int_to_ptr.vmem [resolvable:$true] %s148
          %154 = dma.hbm_to_vmem [thread:$0]  %s147, 6144, %s149, %s138, 384, 192, 12
        $region28: #{tpu_custom_call.1} parent=23 // pred_fallthru
          _
      $region24: #{tpu_custom_call.1} parent=5 // pred_fallthru
        _
      %p155 = scmp.le.s32.totalorder 1, %s15
      %p156 = scmp.lt.s32.totalorder %s15, 3
      %p157 = pnand %p155, %p156
      %p158 = pneg %p157
      // Predicated region
      $region29: #{tpu_custom_call.1} parent=5 // pred_check
        _
      $region30: #{tpu_custom_call.1} parent=5 // pred_check_branch
        %160 = sbr.rel (%p157) target = $region32
      $region31: #{tpu_custom_call.1} parent=5 // pred_region
        %s161 = ssub.s32 %s15, 1
        %s162 = sand.u32 %s49, 1
        %s163 = scalar_lea.sflag [#allocation3], %s162
        %s164 = sand.u32 %s49, 1
        %s165 = smul.addr %s164, 384
        %s166 = scalar_lea.vmem [#allocation2], %s165
        // Predicated region
        $region33: #{tpu_custom_call.1} parent=31 // pred_check
          %p167 = pneg %p62
        $region34: #{tpu_custom_call.1} parent=31 // pred_check_branch
          %169 = sbr.rel (%p167) target = $region36
        $region35: #{tpu_custom_call.1} parent=31 // pred_region
          %170 = dma.done %s163, 6144
        $region36: #{tpu_custom_call.1} parent=31 // pred_fallthru
          _
        %p171 = pneg %p36
        %p172 = pneg %p33
        %s173 = sand.u32 %s49, 1
        %s174 = scalar_lea.sflag [#allocation3], %s173
        %s175 = sand.u32 %s49, 1
        %s176 = smul.addr %s175, 384
        %s177 = scalar_lea.vmem [#allocation2], %s176
        %p178 = pneg %p62
        %p179 = pneg %p59
        %p180 = pneg %p83
        %p181 = pneg %p80
        %p182 = pneg %p109
        %p183 = pneg %p106
        %s184 = sand.u32 %s96, 1
        %s185 = scalar_lea.sflag [#allocation4], %s184
        %s186 = sand.u32 %s96, 1
        %s187 = smul.addr %s186, 24
        %s188 = scalar_lea.vmem [#allocation5], %s187
        %s189 = smul.u32 3, %s20
        %s190 = smul.u32 3, %s20
        %v192 = vld [vmem:[%s0] sm:$0xff]
        %v193 = vld [vmem:[%s166] sm:$0xff]
        %v194 = vld [vmem:[%s166 + $0x8] sm:$0xf]
        %v195 = vld [vmem:[%s166 + $0xc] sm:$0xff]
        %v196 = vld [vmem:[%s166 + $0x14] sm:$0xf]
        %v197 = vld [vmem:[%s166 + $0x18] sm:$0xff]
        %v198 = vld [vmem:[%s166 + $0x20] sm:$0xf]
        %v199 = vld [vmem:[%s166 + $0x24] sm:$0xff]
        %v200 = vld [vmem:[%s166 + $0x2c] sm:$0xf]
        %v201 = vld [vmem:[%s166 + $0x30] sm:$0xff]
        %v202 = vld [vmem:[%s166 + $0x38] sm:$0xf]
        %v203 = vld [vmem:[%s166 + $0x3c] sm:$0xff]
        %v204 = vld [vmem:[%s166 + $0x44] sm:$0xf]
        %v205 = vld [vmem:[%s166 + $0x48] sm:$0xff]
        %v206 = vld [vmem:[%s166 + $0x50] sm:$0xf]
        %v207 = vld [vmem:[%s166 + $0x54] sm:$0xff]
        %v208 = vld [vmem:[%s166 + $0x5c] sm:$0xf]
        %v209 = vld [vmem:[%s166 + $0x60] sm:$0xff]
        %v210 = vld [vmem:[%s166 + $0x68] sm:$0xf]
        %v211 = vld [vmem:[%s166 + $0x6c] sm:$0xff]
        %v212 = vld [vmem:[%s166 + $0x74] sm:$0xf]
        %v213 = vld [vmem:[%s166 + $0x78] sm:$0xff]
        %v214 = vld [vmem:[%s166 + $0x80] sm:$0xf]
        %v215 = vld [vmem:[%s166 + $0x84] sm:$0xff]
        %v216 = vld [vmem:[%s166 + $0x8c] sm:$0xf]
        %v217 = vld [vmem:[%s166 + $0x90] sm:$0xff]
        %v218 = vld [vmem:[%s166 + $0x98] sm:$0xf]
        %v219 = vld [vmem:[%s166 + $0x9c] sm:$0xff]
        %v220 = vld [vmem:[%s166 + $0xa4] sm:$0xf]
        %v221 = vld [vmem:[%s166 + $0xa8] sm:$0xff]
        %v222 = vld [vmem:[%s166 + $0xb0] sm:$0xf]
        %v223 = vld [vmem:[%s166 + $0xb4] sm:$0xff]
        %v224 = vld [vmem:[%s166 + $0xbc] sm:$0xf]
        %v225 = vld [vmem:[%s166 + $0xc0] sm:$0xff]
        %v226 = vld [vmem:[%s166 + $0xc8] sm:$0xf]
        %v227 = vld [vmem:[%s166 + $0xcc] sm:$0xff]
        %v228 = vld [vmem:[%s166 + $0xd4] sm:$0xf]
        %v229 = vld [vmem:[%s166 + $0xd8] sm:$0xff]
        %v230 = vld [vmem:[%s166 + $0xe0] sm:$0xf]
        %v231 = vld [vmem:[%s166 + $0xe4] sm:$0xff]
        %v232 = vld [vmem:[%s166 + $0xec] sm:$0xf]
        %v233 = vld [vmem:[%s166 + $0xf0] sm:$0xff]
        %v234 = vld [vmem:[%s166 + $0xf8] sm:$0xf]
        %v235 = vld [vmem:[%s166 + $0xfc] sm:$0xff]
        %v236 = vld [vmem:[%s166 + $0x104] sm:$0xf]
        %v237 = vld [vmem:[%s166 + $0x108] sm:$0xff]
        %v238 = vld [vmem:[%s166 + $0x110] sm:$0xf]
        %v239 = vld [vmem:[%s166 + $0x114] sm:$0xff]
        %v240 = vld [vmem:[%s166 + $0x11c] sm:$0xf]
        %v241 = vld [vmem:[%s166 + $0x120] sm:$0xff]
        %v242 = vld [vmem:[%s166 + $0x128] sm:$0xf]
        %v243 = vld [vmem:[%s166 + $0x12c] sm:$0xff]
        %v244 = vld [vmem:[%s166 + $0x134] sm:$0xf]
        %v245 = vld [vmem:[%s166 + $0x138] sm:$0xff]
        %v246 = vld [vmem:[%s166 + $0x140] sm:$0xf]
        %v247 = vld [vmem:[%s166 + $0x144] sm:$0xff]
        %v248 = vld [vmem:[%s166 + $0x14c] sm:$0xf]
        %v249 = vld [vmem:[%s166 + $0x150] sm:$0xff]
        %v250 = vld [vmem:[%s166 + $0x158] sm:$0xf]
        %v251 = vld [vmem:[%s166 + $0x15c] sm:$0xff]
        %v252 = vld [vmem:[%s166 + $0x164] sm:$0xf]
        %v253 = vld [vmem:[%s166 + $0x168] sm:$0xff]
        %v254 = vld [vmem:[%s166 + $0x170] sm:$0xf]
        %v255 = vld [vmem:[%s166 + $0x174] sm:$0xff]
        %v256 = vld [vmem:[%s166 + $0x17c] sm:$0xf]
        %v257 = vld [vmem:[%s2] sm:$0xff]
        %259 = vset.pattern.permute.xlu0 0
        %260 = vperm.xlu0 %259, %v257
        %v261 = vpop.permute.xlu0 %260
        %v264 = vunpack.c.l.b16 %v192
        %v265 = vunpack.c.h.b16 %v192
        %v266 = vpack.c.b16 %v264, %v264
        %v267 = vpack.c.b16 %v265, %v265
        %v334 = vunpack.c.l.b16 %v193
        %v335 = vunpack.c.h.b16 %v193
        %v336 = vunpack.c.l.b16 %v194
        %v337 = vunpack.c.l.b16 %v195
        %v338 = vunpack.c.h.b16 %v195
        %v339 = vunpack.c.l.b16 %v196
        %v340 = vunpack.c.l.b16 %v197
        %v341 = vunpack.c.h.b16 %v197
        %v342 = vunpack.c.l.b16 %v198
        %v343 = vunpack.c.l.b16 %v199
        %v344 = vunpack.c.h.b16 %v199
        %v345 = vunpack.c.l.b16 %v200
        %v346 = vunpack.c.l.b16 %v201
        %v347 = vunpack.c.h.b16 %v201
        %v348 = vunpack.c.l.b16 %v202
        %v349 = vunpack.c.l.b16 %v203
        %v350 = vunpack.c.h.b16 %v203
        %v351 = vunpack.c.l.b16 %v204
        %v352 = vunpack.c.l.b16 %v205
        %v353 = vunpack.c.h.b16 %v205
        %v354 = vunpack.c.l.b16 %v206
        %v355 = vunpack.c.l.b16 %v207
        %v356 = vunpack.c.h.b16 %v207
        %v357 = vunpack.c.l.b16 %v208
        %v358 = vunpack.c.l.b16 %v209
        %v359 = vunpack.c.h.b16 %v209
        %v360 = vunpack.c.l.b16 %v210
        %v361 = vunpack.c.l.b16 %v211
        %v362 = vunpack.c.h.b16 %v211
        %v363 = vunpack.c.l.b16 %v212
        %v364 = vunpack.c.l.b16 %v213
        %v365 = vunpack.c.h.b16 %v213
        %v366 = vunpack.c.l.b16 %v214
        %v367 = vunpack.c.l.b16 %v215
        %v368 = vunpack.c.h.b16 %v215
        %v369 = vunpack.c.l.b16 %v216
        %v370 = vunpack.c.l.b16 %v217
        %v371 = vunpack.c.h.b16 %v217
        %v372 = vunpack.c.l.b16 %v218
        %v373 = vunpack.c.l.b16 %v219
        %v374 = vunpack.c.h.b16 %v219
        %v375 = vunpack.c.l.b16 %v220
        %v376 = vunpack.c.l.b16 %v221
        %v377 = vunpack.c.h.b16 %v221
        %v378 = vunpack.c.l.b16 %v222
        %v379 = vunpack.c.l.b16 %v223
        %v380 = vunpack.c.h.b16 %v223
        %v381 = vunpack.c.l.b16 %v224
        %v382 = vunpack.c.l.b16 %v225
        %v383 = vunpack.c.h.b16 %v225
        %v384 = vunpack.c.l.b16 %v226
        %v385 = vunpack.c.l.b16 %v227
        %v386 = vunpack.c.h.b16 %v227
        %v387 = vunpack.c.l.b16 %v228
        %v388 = vunpack.c.l.b16 %v229
        %v389 = vunpack.c.h.b16 %v229
        %v390 = vunpack.c.l.b16 %v230
        %v391 = vunpack.c.l.b16 %v231
        %v392 = vunpack.c.h.b16 %v231
        %v393 = vunpack.c.l.b16 %v232
        %v394 = vunpack.c.l.b16 %v233
        %v395 = vunpack.c.h.b16 %v233
        %v396 = vunpack.c.l.b16 %v234
        %v397 = vunpack.c.l.b16 %v235
        %v398 = vunpack.c.h.b16 %v235
        %v399 = vunpack.c.l.b16 %v236
        %v400 = vunpack.c.l.b16 %v237
        %v401 = vunpack.c.h.b16 %v237
        %v402 = vunpack.c.l.b16 %v238
        %v403 = vunpack.c.l.b16 %v239
        %v404 = vunpack.c.h.b16 %v239
        %v405 = vunpack.c.l.b16 %v240
        %v406 = vunpack.c.l.b16 %v241
        %v407 = vunpack.c.h.b16 %v241
        %v408 = vunpack.c.l.b16 %v242
        %v409 = vunpack.c.l.b16 %v243
        %v410 = vunpack.c.h.b16 %v243
        %v411 = vunpack.c.l.b16 %v244
        %v412 = vunpack.c.l.b16 %v245
        %v413 = vunpack.c.h.b16 %v245
        %v414 = vunpack.c.l.b16 %v246
        %v415 = vunpack.c.l.b16 %v247
        %v416 = vunpack.c.h.b16 %v247
        %v417 = vunpack.c.l.b16 %v248
        %v418 = vunpack.c.l.b16 %v249
        %v419 = vunpack.c.h.b16 %v249
        %v420 = vunpack.c.l.b16 %v250
        %v421 = vunpack.c.l.b16 %v251
        %v422 = vunpack.c.h.b16 %v251
        %v423 = vunpack.c.l.b16 %v252
        %v424 = vunpack.c.l.b16 %v253
        %v425 = vunpack.c.h.b16 %v253
        %v426 = vunpack.c.l.b16 %v254
        %v427 = vunpack.c.l.b16 %v255
        %v428 = vunpack.c.h.b16 %v255
        %v429 = vunpack.c.l.b16 %v256
        %v430 = vpack.c.b16 %v337, %v334
        %v431 = vpack.c.b16 %v338, %v335
        %v432 = vpack.c.b16 %v339, %v336
        %v433 = vpack.c.b16 %v343, %v340
        %v434 = vpack.c.b16 %v344, %v341
        %v435 = vpack.c.b16 %v345, %v342
        %v436 = vpack.c.b16 %v349, %v346
        %v437 = vpack.c.b16 %v350, %v347
        %v438 = vpack.c.b16 %v351, %v348
        %v439 = vpack.c.b16 %v355, %v352
        %v440 = vpack.c.b16 %v356, %v353
        %v441 = vpack.c.b16 %v357, %v354
        %v442 = vpack.c.b16 %v361, %v358
        %v443 = vpack.c.b16 %v362, %v359
        %v444 = vpack.c.b16 %v363, %v360
        %v445 = vpack.c.b16 %v367, %v364
        %v446 = vpack.c.b16 %v368, %v365
        %v447 = vpack.c.b16 %v369, %v366
        %v448 = vpack.c.b16 %v373, %v370
        %v449 = vpack.c.b16 %v374, %v371
        %v450 = vpack.c.b16 %v375, %v372
        %v451 = vpack.c.b16 %v379, %v376
        %v452 = vpack.c.b16 %v380, %v377
        %v453 = vpack.c.b16 %v381, %v378
        %v454 = vpack.c.b16 %v385, %v382
        %v455 = vpack.c.b16 %v386, %v383
        %v456 = vpack.c.b16 %v387, %v384
        %v457 = vpack.c.b16 %v391, %v388
        %v458 = vpack.c.b16 %v392, %v389
        %v459 = vpack.c.b16 %v393, %v390
        %v460 = vpack.c.b16 %v397, %v394
        %v461 = vpack.c.b16 %v398, %v395
        %v462 = vpack.c.b16 %v399, %v396
        %v463 = vpack.c.b16 %v403, %v400
        %v464 = vpack.c.b16 %v404, %v401
        %v465 = vpack.c.b16 %v405, %v402
        %v466 = vpack.c.b16 %v409, %v406
        %v467 = vpack.c.b16 %v410, %v407
        %v468 = vpack.c.b16 %v411, %v408
        %v469 = vpack.c.b16 %v415, %v412
        %v470 = vpack.c.b16 %v416, %v413
        %v471 = vpack.c.b16 %v417, %v414
        %v472 = vpack.c.b16 %v421, %v418
        %v473 = vpack.c.b16 %v422, %v419
        %v474 = vpack.c.b16 %v423, %v420
        %v475 = vpack.c.b16 %v427, %v424
        %v476 = vpack.c.b16 %v428, %v425
        %v477 = vpack.c.b16 %v429, %v426
        %526 = vmatprep.subr.bf16.mxu0 %v431
        %527 = vmatpush1.bf16.msra.mxu0 %v430
        %528 = vmatprep.subr.bf16.mxu0 %v434
        %529 = vmatpush1.bf16.msra.mxu0 %v433
        %530 = vmatprep.subr.bf16.mxu0 %v437
        %531 = vmatpush1.bf16.msra.mxu0 %v436
        %532 = vmatprep.subr.bf16.mxu0 %v440
        %533 = vmatpush1.bf16.msra.mxu0 %v439
        %534 = vmatprep.subr.bf16.mxu0 %v443
        %535 = vmatpush1.bf16.msra.mxu0 %v442
        %536 = vmatprep.subr.bf16.mxu0 %v446
        %537 = vmatpush1.bf16.msra.mxu0 %v445
        %538 = vmatprep.subr.bf16.mxu0 %v449
        %539 = vmatpush1.bf16.msra.mxu0 %v448
        %540 = vmatprep.subr.bf16.mxu0 %v452
        %541 = vmatpush1.bf16.msra.mxu0 %v451
        %542 = vmatprep.subr.bf16.mxu0 %v455
        %543 = vmatpush1.bf16.msra.mxu0 %v454
        %544 = vmatprep.subr.bf16.mxu0 %v458
        %545 = vmatpush1.bf16.msra.mxu0 %v457
        %546 = vmatprep.subr.bf16.mxu0 %v461
        %547 = vmatpush1.bf16.msra.mxu0 %v460
        %548 = vmatprep.subr.bf16.mxu0 %v464
        %549 = vmatpush1.bf16.msra.mxu0 %v463
        %550 = vmatprep.subr.bf16.mxu0 %v467
        %551 = vmatpush1.bf16.msra.mxu0 %v466
        %552 = vmatprep.subr.bf16.mxu0 %v470
        %553 = vmatpush1.bf16.msra.mxu0 %v469
        %554 = vmatprep.subr.bf16.mxu0 %v473
        %555 = vmatpush1.bf16.msra.mxu0 %v472
        %556 = vmatprep.subr.bf16.mxu0 %v476
        %557 = vmatpush1.bf16.msra.mxu0 %v475
        %558 = vmatprep.mubr.bf16.mxu0 %v267
        %559 = vmatmul.mubr.bf16.gmra.mrb[0].mxu0 %v266
        %v560 = vpop.f32.mrb[0].mxu0
        %v561 = vadd.f32 %v261, %v560
        %v562 = vpop.f32.mrb[0].mxu0
        %v563 = vadd.f32 %v261, %v562
        %v564 = vpop.f32.mrb[0].mxu0
        %v565 = vpop.f32.mrb[0].mxu0
        %566 = vdwg.mxu0
        %567 = vmatprep.subr.bf16.mxu0 0
        %568 = vmatpush1.bf16.msra.mxu0 %v432
        %569 = vmatprep.subr.bf16.mxu0 0
        %570 = vmatpush1.bf16.msra.mxu0 %v435
        %571 = vmatprep.subr.bf16.mxu0 0
        %572 = vmatpush1.bf16.msra.mxu0 %v438
        %573 = vmatprep.subr.bf16.mxu0 0
        %574 = vmatpush1.bf16.msra.mxu0 %v441
        %575 = vmatprep.subr.bf16.mxu0 0
        %576 = vmatpush1.bf16.msra.mxu0 %v444
        %577 = vmatprep.subr.bf16.mxu0 0
        %578 = vmatpush1.bf16.msra.mxu0 %v447
        %579 = vmatprep.subr.bf16.mxu0 0
        %580 = vmatpush1.bf16.msra.mxu0 %v450
        %581 = vmatprep.subr.bf16.mxu0 0
        %582 = vmatpush1.bf16.msra.mxu0 %v453
        %583 = vmatprep.subr.bf16.mxu0 0
        %584 = vmatpush1.bf16.msra.mxu0 %v456
        %585 = vmatprep.subr.bf16.mxu0 0
        %586 = vmatpush1.bf16.msra.mxu0 %v459
        %587 = vmatprep.subr.bf16.mxu0 0
        %588 = vmatpush1.bf16.msra.mxu0 %v462
        %589 = vmatprep.subr.bf16.mxu0 0
        %590 = vmatpush1.bf16.msra.mxu0 %v465
        %591 = vmatprep.subr.bf16.mxu0 0
        %592 = vmatpush1.bf16.msra.mxu0 %v468
        %593 = vmatprep.subr.bf16.mxu0 0
        %594 = vmatpush1.bf16.msra.mxu0 %v471
        %595 = vmatprep.subr.bf16.mxu0 0
        %596 = vmatpush1.bf16.msra.mxu0 %v474
        %597 = vmatprep.subr.bf16.mxu0 0
        %598 = vmatpush1.bf16.msra.mxu0 %v477
        %599 = vmatprep.mubr.bf16.mxu0 %v267
        %600 = vmatmul.mubr.bf16.gmra.mrb[0].mxu0 %v266
        %v601 = vpop.f32.mrb[0].mxu0
        %v602 = vadd.f32 %v261, %v601
        %v603 = vpop.f32.mrb[0].mxu0
        %v604 = vpop.f32.mrb[0].mxu0
        %v605 = vpop.f32.mrb[0].mxu0
        %606 = vdwg.mxu0
        %v607 = vmax.f32 %v561, 0.0
        %v608 = vmax.f32 %v563, 0.0
        %v609 = vmax.f32 %v602, 0.0
        %610 = vst [vmem:[%s188] sm:$0xff] %v607
        %611 = vst [vmem:[%s188 + $0x8] sm:$0xff] %v608
        %612 = vst [vmem:[%s188 + $0x10] sm:$0xff] %v609
        %s613 = sand.u32 %s96, 1
        %s614 = scalar_lea.sflag [#allocation4], %s613
        %s615 = sand.u32 %s96, 1
        %s616 = smul.addr %s615, 24
        %s617 = scalar_lea.vmem [#allocation5], %s616
        // Predicated region
        $region37: #{tpu_custom_call.1} parent=31 // pred_check
          %p618 = pneg %p106
        $region38: #{tpu_custom_call.1} parent=31 // pred_check_branch
          %620 = sbr.rel (%p618) target = $region40
        $region39: #{tpu_custom_call.1} parent=31 // pred_region
          %s621 = smul.u32 3, %s20
          %s623 = ssub.s32 384, 384
          %624 = vsyncadd %s614, %s623
          %s625 = smul.addr %s621, 128
          %s626 = scalar_lea.hbm %s3, %s625
          %s628 = sshll.u32 %s617, 4
          %s629 = int_to_ptr.vmem [resolvable:$true] %s628
          %631 = dma.vmem_to_hbm [thread:$0]  %s629, 384, %s626, %s614
        $region40: #{tpu_custom_call.1} parent=31 // pred_fallthru
          _
      $region32: #{tpu_custom_call.1} parent=5 // pred_fallthru
        _
      %p632 = scmp.le.s32.totalorder 2, %s15
      // Predicated region
      $region41: #{tpu_custom_call.1} parent=5 // pred_check
        %p633 = pneg %p632
      $region42: #{tpu_custom_call.1} parent=5 // pred_check_branch
        %635 = sbr.rel (%p633) target = $region44
      $region43: #{tpu_custom_call.1} parent=5 // pred_region
        %s636 = ssub.s32 %s15, 2
        // Predicated region
        $region45: #{tpu_custom_call.1} parent=43 // pred_check
          %p637 = pneg %p112
        $region46: #{tpu_custom_call.1} parent=43 // pred_check_branch
          %639 = sbr.rel (%p637) target = $region48
        $region47: #{tpu_custom_call.1} parent=43 // pred_region
          %s640 = sand.u32 %s97, 1
          %s641 = scalar_lea.sflag [#allocation4], %s640
          %s642 = sand.u32 %s97, 1
          %s643 = smul.addr %s642, 24
          %s644 = scalar_lea.vmem [#allocation5], %s643
          %645 = dma.done %s641, 384
        $region48: #{tpu_custom_call.1} parent=43 // pred_fallthru
          _
      $region44: #{tpu_custom_call.1} parent=5 // pred_fallthru
        _
    $region6: #{tpu_custom_call.1} parent=1 // loop_footer
      %s19 = sadd.s32 1, %s15
    $region7: #{tpu_custom_call.1} parent=1 // loop_footer_branch
      %14 = sbr.rel target = $region3
    $region8: #{tpu_custom_call.1} parent=1 // loop_exit
      _
    %646 = vsyncpa [#allocation3], 1
    %s647 = scalar_lea.sflag [#allocation3], 1
    %648 = vsyncpa %s647, 1
    %649 = vsyncpa [#allocation4], 1
    %s650 = scalar_lea.sflag [#allocation4], 1
    %651 = vsyncpa %s650, 1

</llo_original>
